<compile_context>
chip_gen: v7x
topology: tpu7x:2x2x1
jax: 0.10.0
libtpu: 0.0.40
codegen_flags: <defaults>
</compile_context>

<pallas_src>
import jax
import jax.numpy as jnp
from jax.experimental import pallas as pl
from jax.experimental.pallas import tpu as pltpu

_MiB = 1024 * 1024


# --------------------------------------------------------------------------
# Kernel bodies
# --------------------------------------------------------------------------
def _make_kernel(mxu_dtype, acc_in_pred):
    """Build the (i, k) grid-step kernel.

    mxu_dtype:   None -> feed the dot in the native dtype; otherwise cast the
                 MXU operands to this dtype (f32 accumulation either way).
    acc_in_pred: True -> accumulate directly in the VMEM-resident pred block
                 (pred dtype must be f32); False -> use an f32 scratch and
                 cast to pred dtype on the last k step.
    """

    def _mxu(x):
        return x if mxu_dtype is None else x.astype(mxu_dtype)

    if acc_in_pred:

        def kernel(u_ref, a_ref, b_ref, pred_ref, codes_ref):
            k = pl.program_id(1)
            codes = jnp.abs(u_ref[...])
            codes_ref[...] = codes.astype(codes_ref.dtype)

            # Fold the bias into the (resident) output block at k == 0.
            @pl.when(k == 0)
            def _():
                pred_ref[...] = jnp.broadcast_to(
                    b_ref[...].astype(pred_ref.dtype), pred_ref.shape
                )

            pred_ref[...] += jnp.dot(
                _mxu(codes), _mxu(a_ref[...]),
                preferred_element_type=jnp.float32,
            )

        return kernel

    def kernel(u_ref, a_ref, b_ref, pred_ref, codes_ref, acc_ref):
        k = pl.program_id(1)
        codes = jnp.abs(u_ref[...])
        codes_ref[...] = codes.astype(codes_ref.dtype)

        @pl.when(k == 0)
        def _():
            acc_ref[...] = jnp.broadcast_to(
                b_ref[...].astype(jnp.float32), acc_ref.shape
            )

        acc_ref[...] += jnp.dot(
            _mxu(codes), _mxu(a_ref[...]),
            preferred_element_type=jnp.float32,
        )

        @pl.when(k == pl.num_programs(1) - 1)
        def _():
            pred_ref[...] = acc_ref[...].astype(pred_ref.dtype)

    return kernel


# --------------------------------------------------------------------------
# Tiling helpers
# --------------------------------------------------------------------------
def _largest_divisor_tile(dim, preferred, step=8):
    """Largest multiple of `step` <= preferred that divides dim, else dim."""
    t = (min(preferred, dim) // step) * step
    while t >= step:
        if dim % t == 0:
            return t
        t -= step
    return dim


def _vmem_footprint(tm, tk, d, u_item, a_item, p_item, c_item,
                    use_acc, atoms_bufs):
    inputs = (2 * tm * tk * u_item            # |U| tiles (double buffered)
              + atoms_bufs * tk * d * a_item  # atoms slab
              + 2 * d * p_item)               # bias row
    outputs = 2 * tm * d * p_item + 2 * tm * tk * c_item
    acc = tm * d * 4 if use_acc else 0
    return inputs + outputs + acc


# --------------------------------------------------------------------------
# Wrapper
# --------------------------------------------------------------------------
def sparse_nnmf_forward(unsigned_codes, atoms, bias=None, *,
                        tm=256, tk=None, mxu_bf16=True):
    """pred = |unsigned_codes| @ atoms (+ bias); returns (pred, codes).

    mxu_bf16: feed the MXU bfloat16 operands (f32 accumulation).  Set False
    if an exact native-dtype matmul is required.
    """
    n, f = unsigned_codes.shape
    f2, d = atoms.shape
    assert f == f2, "unsigned_codes and atoms feature dims must match"

    codes_dtype = unsigned_codes.dtype
    pred_dtype = jnp.result_type(unsigned_codes.dtype, atoms.dtype)
    acc_in_pred = pred_dtype == jnp.float32  # accumulate straight into pred

    u_item = jnp.dtype(unsigned_codes.dtype).itemsize
    a_item = jnp.dtype(atoms.dtype).itemsize
    p_item = jnp.dtype(pred_dtype).itemsize
    c_item = jnp.dtype(codes_dtype).itemsize

    # ---- generation-aware VMEM budget ------------------------------------
    try:
        vmem_cap = int(pltpu.get_tpu_info().vmem_capacity_bytes)
    except Exception:
        vmem_cap = 64 * _MiB  # conservative fallback (v7x physical size)
    budget = max(32 * _MiB, min(int(vmem_cap * 0.85), vmem_cap - 8 * _MiB))

    # ---- tile selection ---------------------------------------------------
    # tm: largest multiple-of-8 divisor of N <= requested; prefer >= 2 i-steps
    # so both v7x TensorCores get work (costs nothing on single-TC chips).
    tm_pref = _largest_divisor_tile(n, tm)
    if n // tm_pref < 2 and n >= 16:
        tm_half = _largest_divisor_tile(n, n // 2)
        if tm_half < n and n % tm_half == 0 and n // tm_half >= 2:
            tm_pref = tm_half
    tm_opts = []
    t = tm_pref
    while t >= 8:
        if n % t == 0 and (t % 8 == 0 or t == n):
            tm_opts.append(t)
        t //= 2
    if not tm_opts:
        tm_opts = [n]

    # tk: prefer the full feature dim (atoms DMA'd exactly once for the whole
    # kernel, constant block index), then 128-aligned divisors.
    if tk is not None:
        tk_opts = [_largest_divisor_tile(f, tk, step=128)]
    else:
        tk_opts = [f] + [t for t in (2048, 1024, 512, 256, 128)
                         if t < f and f % t == 0]

    chosen = None
    for tk_c in tk_opts:
        for tm_c in tm_opts:
            if _vmem_footprint(tm_c, tk_c, d, u_item, a_item, p_item, c_item,
                               not acc_in_pred, 2) <= budget:
                chosen = (tm_c, tk_c)
                break
        if chosen is not None:
            break
    if chosen is None:
        # TODO(synk): shard D in the wrapper (per-D-slice pallas_call on
        # atoms[:, j0:j1] / bias slice) when even the smallest tiles exceed
        # the VMEM budget (very large d_model on v7x).
        chosen = (tm_opts[-1], tk_opts[-1])
    tm, tk = chosen
    assert n % tm == 0 and f % tk == 0

    grid = (n // tm, f // tk)
    k_steps = grid[1]

    # Deeper atoms buffering only once per-step MXU time shrinks (bf16) and
    # only on big-VMEM chips (v5e/v6e, 128 MiB); v7x keeps 2 buffers.
    atoms_bufs = 2
    if (k_steps >= 3 and vmem_cap >= 96 * _MiB
            and _vmem_footprint(tm, tk, d, u_item, a_item, p_item, c_item,
                                not acc_in_pred, 3) <= budget):
        atoms_bufs = 3

    if atoms_bufs == 3:
        atoms_spec = pl.BlockSpec((tk, d), lambda i, k: (k, 0),
                                  pipeline_mode=pl.Buffered(3))
    else:
        atoms_spec = pl.BlockSpec((tk, d), lambda i, k: (k, 0))

    est = _vmem_footprint(tm, tk, d, u_item, a_item, p_item, c_item,
                          not acc_in_pred, atoms_bufs)
    vmem_limit = int(min(budget, max(est + 4 * _MiB, 32 * _MiB)))

    if bias is None:
        bias_row = jnp.zeros((1, d), pred_dtype)
    else:
        bias_row = jnp.asarray(bias).reshape(1, d).astype(pred_dtype)

    kernel = _make_kernel(jnp.bfloat16 if mxu_bf16 else None, acc_in_pred)
    scratch_shapes = [] if acc_in_pred else [pltpu.VMEM((tm, d), jnp.float32)]

    pred, codes = pl.pallas_call(
        kernel,
        out_shape=(
            jax.ShapeDtypeStruct((n, d), pred_dtype),
            jax.ShapeDtypeStruct((n, f), codes_dtype),
        ),
        grid_spec=pltpu.PrefetchScalarGridSpec(
            num_scalar_prefetch=0,
            grid=grid,
            in_specs=[
                pl.BlockSpec((tm, tk), lambda i, k: (i, k)),   # |U| tile
                atoms_spec,                                     # atoms slab
                pl.BlockSpec((1, d), lambda i, k: (0, 0)),      # bias row
            ],
            out_specs=[
                pl.BlockSpec((tm, d), lambda i, k: (i, 0)),     # pred (resident acc)
                pl.BlockSpec((tm, tk), lambda i, k: (i, k)),    # codes (written once)
            ],
            scratch_shapes=scratch_shapes,
        ),
        compiler_params=pltpu.CompilerParams(
            dimension_semantics=("parallel", "arbitrary"),
            vmem_limit_bytes=vmem_limit,
        ),
    )(unsigned_codes, atoms, bias_row)

    return pred, codes


if __name__ == "__main__":
    # Small shapes consistent with the module (N samples, n_features, d_model).
    n_samples, n_features, d_model = 256, 256, 256

    key = jax.random.PRNGKey(0)
    k_atoms, k_codes = jax.random.split(key)

    # __init__: atoms = randn(F, D) / sqrt(D), then norm_atoms() (L2 along dim=1).
    atoms = jax.random.normal(k_atoms, (n_features, d_model), jnp.float32)
    atoms = atoms / jnp.sqrt(jnp.float32(d_model))
    atoms = atoms / jnp.linalg.norm(atoms, axis=1, keepdims=True)

    # train(): unsigned_codes = randn(N, F) / sqrt(F).
    unsigned_codes = jax.random.normal(
        k_codes, (n_samples, n_features), jnp.float32
    ) / jnp.sqrt(jnp.float32(n_features))

    # bias=True branch: zeros(d_model).
    bias = jnp.zeros((d_model,), jnp.float32)

    # Plain-JAX reference.
    codes_ref = jnp.abs(unsigned_codes)
    pred_ref = codes_ref @ atoms + bias[None]

    # Exact native-f32 MXU path.
    pred_f32, codes_f32 = jax.block_until_ready(
        sparse_nnmf_forward(unsigned_codes, atoms, bias, mxu_bf16=False)
    )
    assert pred_f32.dtype == jnp.float32 and codes_f32.dtype == unsigned_codes.dtype
    assert jnp.allclose(codes_f32, codes_ref, atol=1e-6), "codes mismatch (f32)"
    assert jnp.allclose(pred_f32, pred_ref, atol=1e-4, rtol=1e-4), "pred mismatch (f32)"

    # Default fast path: bf16 MXU operands, f32 accumulation.
    pred_bf, codes_bf = jax.block_until_ready(
        sparse_nnmf_forward(unsigned_codes, atoms, bias)
    )
    assert jnp.allclose(codes_bf, codes_ref, atol=1e-6), "codes mismatch (bf16)"
    assert jnp.allclose(pred_bf, pred_ref, atol=2e-2, rtol=2e-2), "pred mismatch (bf16)"

    print("KERNEL_OK")
</pallas_src>

<mosaic_0001>
module attributes {stable_mosaic.version = 11 : i64} {
  func.func @kernel(%arg0: i32, %arg1: i32, %arg2: memref<128x256xf32, #tpu.memory_space<vmem>>, %arg3: memref<256x256xf32, #tpu.memory_space<vmem>>, %arg4: memref<1x256xf32, #tpu.memory_space<vmem>>, %arg5: memref<128x256xf32, #tpu.memory_space<vmem>>, %arg6: memref<128x256xf32, #tpu.memory_space<vmem>>) attributes {dimension_semantics = [#tpu.dimension_semantics<parallel>, #tpu.dimension_semantics<arbitrary>], iteration_bounds = array<i64: 2, 1>, scalar_prefetch = 0 : i64, scratch_operands = 0 : i64, tpu.core_type = #tpu.core_type<tc>, window_params = [{transform_indices = @transform_0, window_bounds = array<i64: 128, 256>}, {transform_indices = @transform_1, window_bounds = array<i64: 256, 256>}, {pipeline_mode = #tpu.pipeline_mode<synchronous>, transform_indices = @transform_2, window_bounds = array<i64: 1, 256>}, {transform_indices = @transform_3, window_bounds = array<i64: 128, 256>}, {transform_indices = @transform_4, window_bounds = array<i64: 128, 256>}]} {
    %c0 = arith.constant 0 : index
    %c0_0 = arith.constant 0 : index
    %0 = vector.load %arg2[%c0, %c0_0] : memref<128x256xf32, #tpu.memory_space<vmem>>, vector<128x256xf32>
    %1 = math.absf %0 : vector<128x256xf32>
    %c0_1 = arith.constant 0 : index
    %c0_2 = arith.constant 0 : index
    %2 = vector.load %arg6[%c0_1, %c0_2] : memref<128x256xf32, #tpu.memory_space<vmem>>, vector<128x256xf32>
    tpu.vector_store %arg6[%c0_1, %c0_2], %1 {strides = array<i32>} : memref<128x256xf32, #tpu.memory_space<vmem>>, vector<128x256xf32>,
    %c0_i32 = arith.constant 0 : i32
    %3 = arith.cmpi eq, %arg1, %c0_i32 : i32
    %4 = arith.extui %3 : i1 to i32
    %c0_i32_3 = arith.constant 0 : i32
    %5 = arith.cmpi ne, %4, %c0_i32_3 : i32
    scf.if %5 {
      %c0_10 = arith.constant 0 : index
      %c0_11 = arith.constant 0 : index
      %11 = vector.load %arg4[%c0_10, %c0_11] : memref<1x256xf32, #tpu.memory_space<vmem>>, vector<1x256xf32>
      %12 = vector.shape_cast %11 : vector<1x256xf32> to vector<1x256xf32>
      %13 = vector.broadcast %12 : vector<1x256xf32> to vector<128x256xf32>
      %c0_12 = arith.constant 0 : index
      %c0_13 = arith.constant 0 : index
      %14 = vector.load %arg5[%c0_12, %c0_13] : memref<128x256xf32, #tpu.memory_space<vmem>>, vector<128x256xf32>
      tpu.vector_store %arg5[%c0_12, %c0_13], %13 {strides = array<i32>} : memref<128x256xf32, #tpu.memory_space<vmem>>, vector<128x256xf32>,
    } else {
    }
    %c0_4 = arith.constant 0 : index
    %c0_5 = arith.constant 0 : index
    %6 = vector.load %arg5[%c0_4, %c0_5] : memref<128x256xf32, #tpu.memory_space<vmem>>, vector<128x256xf32>
    %c0_6 = arith.constant 0 : index
    %c0_7 = arith.constant 0 : index
    %7 = vector.load %arg3[%c0_6, %c0_7] : memref<256x256xf32, #tpu.memory_space<vmem>>, vector<256x256xf32>
    %cst = arith.constant dense<0.000000e+00> : vector<128x256xf32>
    %8 = tpu.matmul %1, %7, %cst {dimension_numbers = #tpu.dot_dimension_numbers<[1], [0], [0], [1], [0, 0, 1, 1], [], []>} : vector<128x256xf32>, vector<256x256xf32>, vector<128x256xf32> -> vector<128x256xf32>
    %9 = arith.addf %6, %8 : vector<128x256xf32>
    %c0_8 = arith.constant 0 : index
    %c0_9 = arith.constant 0 : index
    %10 = vector.load %arg5[%c0_8, %c0_9] : memref<128x256xf32, #tpu.memory_space<vmem>>, vector<128x256xf32>
    tpu.vector_store %arg5[%c0_8, %c0_9], %9 {strides = array<i32>} : memref<128x256xf32, #tpu.memory_space<vmem>>, vector<128x256xf32>,
    return
  }
  func.func @transform_0(%arg0: i32, %arg1: i32) -> (i32, i32) {
    %c0_i32 = arith.constant 0 : i32
    return %arg0, %arg1 : i32, i32
  }
  func.func @transform_1(%arg0: i32, %arg1: i32) -> (i32, i32) {
    %c0_i32 = arith.constant 0 : i32
    %c0_i32_0 = arith.constant 0 : i32
    return %arg1, %c0_i32 : i32, i32
  }
  func.func @transform_2(%arg0: i32, %arg1: i32) -> (i32, i32) {
    %c0_i32 = arith.constant 0 : i32
    %c0_i32_0 = arith.constant 0 : i32
    %c0_i32_1 = arith.constant 0 : i32
    return %c0_i32, %c0_i32_0 : i32, i32
  }
  func.func @transform_3(%arg0: i32, %arg1: i32) -> (i32, i32) {
    %c0_i32 = arith.constant 0 : i32
    %c0_i32_0 = arith.constant 0 : i32
    return %arg0, %c0_i32 : i32, i32
  }
  func.func @transform_4(%arg0: i32, %arg1: i32) -> (i32, i32) {
    %c0_i32 = arith.constant 0 : i32
    return %arg0, %arg1 : i32, i32
  }
}

</mosaic_0001>

<llo_original>
// kernel: tpu_custom_call.1
$region0: #{tpu_custom_call.1}
  #allocation0 [shape = 'u32[]', space=smem, size = 0x4, offset = 0x4, fixed_abs, tag = 'smem constant byte address 0x4 - core index']
  #allocation1 [shape = 'u32[144,128]{1,0:T(1,128)}', space=vmem, size = 0x12000, scoped, tag = 'internal scratch']
  %s0 = inlined_call_operand.hbm [shape: f32[256,256], index: 0, kind: input, shape index: {}]
  %s1 = inlined_call_operand.hbm [shape: f32[256,256], index: 1, kind: input, shape index: {}]
  %s2 = inlined_call_operand.vmem [shape: f32[1,256], index: 2, kind: input, shape index: {}]
  %s3 = inlined_call_operand.hbm [shape: f32[256,256], index: 3, kind: output, shape index: {0}]
  %s4 = inlined_call_operand.hbm [shape: f32[256,256], index: 4, kind: output, shape index: {1}]
  %5 = xla_tuple %s3, %s4
  %s6 = sld [smem:[#allocation0]]
  $region65: #{tpu_custom_call.1} parent=0
    _
  %s8 = ssub.s32 1, %s6
  %s9 = scalar_select 0, %s8, %s6
  $region1: #{tpu_custom_call.1} parent=0
    #allocation2 [shape = 'u8[262144]{0}', space=vmem, size = 0x40000, scoped, tag = 'input window, operand 0']
    #allocation3 [shape = 's32[2]{0}', space=sflag, size = 0x8, scoped, tag = 'scoped memory for tpu_custom_call.1']
    #allocation4 [shape = 's32[2]{0}', space=sflag, size = 0x8, scoped, tag = 'scoped memory for tpu_custom_call.1']
    #allocation5 [shape = 'u8[262144]{0}', space=vmem, size = 0x40000, scoped, tag = 'input window, operand 1, single buffered']
    #allocation6 [shape = 's32[1]{0}', space=sflag, size = 0x4, scoped, tag = 'scoped memory for tpu_custom_call.1']
    #allocation7 [shape = 'u8[262144]{0}', space=vmem, size = 0x40000, scoped, tag = 'output window, operand 0']
    #allocation8 [shape = 'u8[262144]{0}', space=vmem, size = 0x40000, scoped, tag = 'output window, operand 1']
    #allocation9 [shape = 's32[2]{0}', space=sflag, size = 0x8, scoped, tag = 'scoped memory for tpu_custom_call.1']
    %10 = vsyncpa [#allocation3], 0
    %s11 = scalar_lea.sflag [#allocation3], 1
    %12 = vsyncpa %s11, 0
    %13 = vsyncpa [#allocation6], 0
    %14 = vsyncpa [#allocation4], 0
    %s15 = scalar_lea.sflag [#allocation4], 1
    %16 = vsyncpa %s15, 0
    %17 = vsyncpa [#allocation9], 0
    %s18 = scalar_lea.sflag [#allocation9], 1
    %19 = vsyncpa %s18, 0
    loop: start=0, step=1, limit=4
    $region2: #{tpu_custom_call.1} parent=1 // loop_pre_header
      _
    $region3: #{tpu_custom_call.1} parent=1 // loop_header
      %s21 = sphi 0, %s25
      %p22 = scmp.ge.s32.totalorder %s21, 4
      %s28 = sphi 0, %s40
      %s29 = sphi 0, %s36
      %s30 = sphi 0, %s28
      %s31 = sphi 0, %s29
      %s32 = sphi 0, %s30
      %s33 = sphi 0, %s31
      %s45 = sphi 0, %s47
      %s48 = sphi 0, %s45
      %s49 = sphi 0, %s48
      %s65 = sphi 0, %s49
      %s71 = sphi 0, %s73
      %s74 = sphi 0, %s71
      %s75 = sphi 0, %s74
      %s91 = sphi 0, %s75
      %s95 = sphi 0, %s95
      %s97 = sphi 0, %s95
      %s98 = sphi 0, %s97
      %s112 = sphi 0, %s98
      %s118 = sphi 0, %s120
      %s121 = sphi 0, %s118
      %s122 = sphi 0, %s121
      %s138 = sphi 0, %s122
      %s146 = sphi 0, %s148
      %s149 = sphi 0, %s146
      %s150 = sphi 0, %s149
      %s166 = sphi 0, %s150
    $region4: #{tpu_custom_call.1} parent=1 // loop_header_branch
      %24 = sbr.rel (%p22) target = $region8
    $region5: #{tpu_custom_call.1} parent=1 // loop_body
      %s26 = ssub.s32 %s21, 1
      %s27 = ssub.s32 %s21, 2
      %s34 = sadd.s32 1, %s29
      %p35 = scmp.ge.s32.totalorder %s34, 1
      %s36 = scalar_select %p35, 0, %s34
      %s37 = sadd.s32 1, %s28
      %s38 = scalar_select %p35, %s37, %s28
      %p39 = scmp.ge.s32.totalorder %s38, 2
      %s40 = scalar_select %p39, 0, %s38
      %s41 = ssub.s32 %s28, %s40
      %s42 = ssub.s32 %s29, %s36
      %s43 = sor.u32 %s41, %s42
      %p44 = scmp.eq.s32.totalorder %s43, 0
      %s46 = sadd.s32 %s45, 1
      %s47 = scalar_select %p44, %s45, %s46
      %p50 = pneg %p44
      %p51 = scmp.eq.s32.totalorder %s21, 1
      %p52 = por %p50, %p51
      %p53 = scmp.ne.s32.totalorder %s45, %s48
      %p54 = scmp.eq.s32.totalorder %s21, 0
      %p55 = por %p53, %p54
      %p56 = scmp.ne.s32.totalorder %s45, %s48
      %p57 = scmp.eq.s32.totalorder %s26, 1
      %p58 = por %p56, %p57
      %p59 = scmp.ne.s32.totalorder %s48, %s49
      %p60 = scmp.eq.s32.totalorder %s26, 0
      %p61 = por %p59, %p60
      %p62 = scmp.ne.s32.totalorder %s48, %s49
      %p63 = scmp.eq.s32.totalorder %s27, 1
      %p64 = por %p62, %p63
      %p66 = scmp.ne.s32.totalorder %s49, %s65
      %p67 = scmp.eq.s32.totalorder %s27, 0
      %p68 = por %p66, %p67
      %s69 = ssub.s32 %s29, %s36
      %p70 = scmp.eq.s32.totalorder %s69, 0
      %s72 = sadd.s32 %s71, 1
      %s73 = scalar_select %p70, %s71, %s72
      %p76 = pneg %p70
      %p77 = scmp.eq.s32.totalorder %s21, 1
      %p78 = por %p76, %p77
      %p79 = scmp.ne.s32.totalorder %s71, %s74
      %p80 = scmp.eq.s32.totalorder %s21, 0
      %p81 = por %p79, %p80
      %p82 = scmp.ne.s32.totalorder %s71, %s74
      %p83 = scmp.eq.s32.totalorder %s26, 1
      %p84 = por %p82, %p83
      %p85 = scmp.ne.s32.totalorder %s74, %s75
      %p86 = scmp.eq.s32.totalorder %s26, 0
      %p87 = por %p85, %p86
      %p88 = scmp.ne.s32.totalorder %s74, %s75
      %p89 = scmp.eq.s32.totalorder %s27, 1
      %p90 = por %p88, %p89
      %p92 = scmp.ne.s32.totalorder %s75, %s91
      %p93 = scmp.eq.s32.totalorder %s27, 0
      %p94 = por %p92, %p93
      %s96 = sadd.s32 %s95, 1
      %p99 = scmp.eq.s32.totalorder %s21, 1
      %p100 = scmp.ne.s32.totalorder %s95, %s97
      %p101 = scmp.eq.s32.totalorder %s21, 0
      %p102 = por %p100, %p101
      %p103 = scmp.ne.s32.totalorder %s95, %s97
      %p104 = scmp.eq.s32.totalorder %s26, 1
      %p105 = por %p103, %p104
      %p106 = scmp.ne.s32.totalorder %s97, %s98
      %p107 = scmp.eq.s32.totalorder %s26, 0
      %p108 = por %p106, %p107
      %p109 = scmp.ne.s32.totalorder %s97, %s98
      %p110 = scmp.eq.s32.totalorder %s27, 1
      %p111 = por %p109, %p110
      %p113 = scmp.ne.s32.totalorder %s98, %s112
      %p114 = scmp.eq.s32.totalorder %s27, 0
      %p115 = por %p113, %p114
      %s116 = ssub.s32 %s28, %s40
      %p117 = scmp.eq.s32.totalorder %s116, 0
      %s119 = sadd.s32 %s118, 1
      %s120 = scalar_select %p117, %s118, %s119
      %p123 = pneg %p117
      %p124 = scmp.eq.s32.totalorder %s21, 1
      %p125 = por %p123, %p124
      %p126 = scmp.ne.s32.totalorder %s118, %s121
      %p127 = scmp.eq.s32.totalorder %s21, 0
      %p128 = por %p126, %p127
      %p129 = scmp.ne.s32.totalorder %s118, %s121
      %p130 = scmp.eq.s32.totalorder %s26, 1
      %p131 = por %p129, %p130
      %p132 = scmp.ne.s32.totalorder %s121, %s122
      %p133 = scmp.eq.s32.totalorder %s26, 0
      %p134 = por %p132, %p133
      %p135 = scmp.ne.s32.totalorder %s121, %s122
      %p136 = scmp.eq.s32.totalorder %s27, 1
      %p137 = por %p135, %p136
      %p139 = scmp.ne.s32.totalorder %s122, %s138
      %p140 = scmp.eq.s32.totalorder %s27, 0
      %p141 = por %p139, %p140
      %s142 = ssub.s32 %s28, %s40
      %s143 = ssub.s32 %s29, %s36
      %s144 = sor.u32 %s142, %s143
      %p145 = scmp.eq.s32.totalorder %s144, 0
      %s147 = sadd.s32 %s146, 1
      %s148 = scalar_select %p145, %s146, %s147
      %p151 = pneg %p145
      %p152 = scmp.eq.s32.totalorder %s21, 1
      %p153 = por %p151, %p152
      %p154 = scmp.ne.s32.totalorder %s146, %s149
      %p155 = scmp.eq.s32.totalorder %s21, 0
      %p156 = por %p154, %p155
      %p157 = scmp.ne.s32.totalorder %s146, %s149
      %p158 = scmp.eq.s32.totalorder %s26, 1
      %p159 = por %p157, %p158
      %p160 = scmp.ne.s32.totalorder %s149, %s150
      %p161 = scmp.eq.s32.totalorder %s26, 0
      %p162 = por %p160, %p161
      %p163 = scmp.ne.s32.totalorder %s149, %s150
      %p164 = scmp.eq.s32.totalorder %s27, 1
      %p165 = por %p163, %p164
      %p167 = scmp.ne.s32.totalorder %s150, %s166
      %p168 = scmp.eq.s32.totalorder %s27, 0
      %p169 = por %p167, %p168
      %p170 = scmp.le.s32.totalorder 1, %s21
      %p171 = scmp.lt.s32.totalorder %s21, 3
      %p172 = pnand %p170, %p171
      %p173 = pneg %p172
      // Predicated region
      $region9: #{tpu_custom_call.1} parent=5 // pred_check
        _
      $region10: #{tpu_custom_call.1} parent=5 // pred_check_branch
        %175 = sbr.rel (%p172) target = $region12
      $region11: #{tpu_custom_call.1} parent=5 // pred_region
        %s176 = ssub.s32 %s21, 1
        // Predicated region
        $region13: #{tpu_custom_call.1} parent=11 // pred_check
          %p177 = pneg %p87
        $region14: #{tpu_custom_call.1} parent=11 // pred_check_branch
          %179 = sbr.rel (%p177) target = $region16
        $region15: #{tpu_custom_call.1} parent=11 // pred_region
          %s180 = smul.u32 32, %s31
          %s182 = ssub.s32 8192, 8192
          %183 = vsyncadd [#allocation6], %s182
          %s184 = smul.addr %s180, 2
          %s185 = smul.addr %s184, 128
          %s186 = scalar_lea.hbm %s1, %s185
          %s187 = sshll.u32 [#allocation5], 4
          %s188 = int_to_ptr.vmem [resolvable:$true] %s187
          %193 = dma.hbm_to_vmem [thread:$0]  %s186, 8192, %s188, [#allocation6], 256, 256, 16
        $region16: #{tpu_custom_call.1} parent=11 // pred_fallthru
          _
        // Predicated region
        $region17: #{tpu_custom_call.1} parent=11 // pred_check
          %p194 = pneg %p108
        $region18: #{tpu_custom_call.1} parent=11 // pred_check_branch
          %196 = sbr.rel (%p194) target = $region20
        $region19: #{tpu_custom_call.1} parent=11 // pred_region
          _
        $region20: #{tpu_custom_call.1} parent=11 // pred_fallthru
          _
      $region12: #{tpu_custom_call.1} parent=5 // pred_fallthru
        _
      %p197 = scmp.lt.s32.totalorder %s21, 2
      // Predicated region
      $region21: #{tpu_custom_call.1} parent=5 // pred_check
        %p198 = pneg %p197
      $region22: #{tpu_custom_call.1} parent=5 // pred_check_branch
        %200 = sbr.rel (%p198) target = $region24
      $region23: #{tpu_custom_call.1} parent=5 // pred_region
        // Predicated region
        $region25: #{tpu_custom_call.1} parent=23 // pred_check
          %p201 = pneg %p55
        $region26: #{tpu_custom_call.1} parent=23 // pred_check_branch
          %203 = sbr.rel (%p201) target = $region28
        $region27: #{tpu_custom_call.1} parent=23 // pred_region
          %s204 = sand.u32 %s45, 1
          %s205 = scalar_lea.sflag [#allocation3], %s204
          %s206 = sand.u32 %s45, 1
          %s207 = smul.addr %s206, 256
          %s208 = scalar_lea.vmem [#allocation2], %s207
          %s209 = smul.u32 16, %s28
          %s210 = smul.u32 2, %s29
          %s212 = ssub.s32 4096, 4096
          %213 = vsyncadd %s205, %s212
          %s214 = smul.addr %s209, 2
          %s215 = sadd.s32 %s210, %s214
          %s216 = smul.addr %s215, 128
          %s217 = scalar_lea.hbm %s0, %s216
          %s218 = sshll.u32 %s208, 4
          %s219 = int_to_ptr.vmem [resolvable:$true] %s218
          %224 = dma.hbm_to_vmem [thread:$0]  %s217, 4096, %s219, %s205, 256, 256, 16
        $region28: #{tpu_custom_call.1} parent=23 // pred_fallthru
          _
      $region24: #{tpu_custom_call.1} parent=5 // pred_fallthru
        _
      %p225 = scmp.le.s32.totalorder 1, %s21
      %p226 = scmp.lt.s32.totalorder %s21, 3
      %p227 = pnand %p225, %p226
      %p228 = pneg %p227
      // Predicated region
      $region29: #{tpu_custom_call.1} parent=5 // pred_check
        _
      $region30: #{tpu_custom_call.1} parent=5 // pred_check_branch
        %230 = sbr.rel (%p227) target = $region32
      $region31: #{tpu_custom_call.1} parent=5 // pred_region
        %s231 = ssub.s32 %s21, 1
        %s232 = sand.u32 %s48, 1
        %s233 = scalar_lea.sflag [#allocation3], %s232
        %s234 = sand.u32 %s48, 1
        %s235 = smul.addr %s234, 256
        %s236 = scalar_lea.vmem [#allocation2], %s235
        // Predicated region
        $region33: #{tpu_custom_call.1} parent=31 // pred_check
          %p237 = pneg %p61
        $region34: #{tpu_custom_call.1} parent=31 // pred_check_branch
          %239 = sbr.rel (%p237) target = $region36
        $region35: #{tpu_custom_call.1} parent=31 // pred_region
          %240 = dma.done %s233, 4096
        $region36: #{tpu_custom_call.1} parent=31 // pred_fallthru
          _
        // Predicated region
        $region37: #{tpu_custom_call.1} parent=31 // pred_check
          %p241 = pneg %p87
        $region38: #{tpu_custom_call.1} parent=31 // pred_check_branch
          %243 = sbr.rel (%p241) target = $region40
        $region39: #{tpu_custom_call.1} parent=31 // pred_region
          %244 = dma.done [#allocation6], 8192
        $region40: #{tpu_custom_call.1} parent=31 // pred_fallthru
          _
        %s245 = sand.u32 %s48, 1
        %s246 = scalar_lea.sflag [#allocation3], %s245
        %s247 = sand.u32 %s48, 1
        %s248 = smul.addr %s247, 256
        %s249 = scalar_lea.vmem [#allocation2], %s248
        %p250 = pneg %p61
        %p251 = pneg %p58
        %p252 = pneg %p87
        %p253 = pneg %p84
        %p254 = pneg %p108
        %p255 = pneg %p105
        %p256 = pneg %p134
        %p257 = pneg %p131
        %s258 = sand.u32 %s121, 1
        %s259 = scalar_lea.sflag [#allocation4], %s258
        %s260 = sand.u32 %s121, 1
        %s261 = smul.addr %s260, 256
        %s262 = scalar_lea.vmem [#allocation7], %s261
        %p263 = pneg %p162
        %p264 = pneg %p159
        %s265 = sand.u32 %s149, 1
        %s266 = scalar_lea.sflag [#allocation9], %s265
        %s267 = sand.u32 %s149, 1
        %s268 = smul.addr %s267, 256
        %s269 = scalar_lea.vmem [#allocation8], %s268
        %s270 = smul.u32 16, %s30
        %s271 = smul.u32 2, %s31
        %s272 = smul.u32 32, %s31
        %s273 = smul.u32 16, %s30
        %s274 = smul.u32 16, %s30
        %s275 = smul.u32 2, %s31
        %v276 = vld [vmem:[%s236] sm:$0xff]
        %v277 = vld [vmem:[%s236 + $0x8] sm:$0xff]
        %v278 = vld [vmem:[%s236 + $0x10] sm:$0xff]
        %v279 = vld [vmem:[%s236 + $0x18] sm:$0xff]
        %v280 = vld [vmem:[%s236 + $0x20] sm:$0xff]
        %v281 = vld [vmem:[%s236 + $0x28] sm:$0xff]
        %v282 = vld [vmem:[%s236 + $0x30] sm:$0xff]
        %v283 = vld [vmem:[%s236 + $0x38] sm:$0xff]
        %v284 = vld [vmem:[%s236 + $0x40] sm:$0xff]
        %v285 = vld [vmem:[%s236 + $0x48] sm:$0xff]
        %v286 = vld [vmem:[%s236 + $0x50] sm:$0xff]
        %v287 = vld [vmem:[%s236 + $0x58] sm:$0xff]
        %v288 = vld [vmem:[%s236 + $0x60] sm:$0xff]
        %v289 = vld [vmem:[%s236 + $0x68] sm:$0xff]
        %v290 = vld [vmem:[%s236 + $0x70] sm:$0xff]
        %v291 = vld [vmem:[%s236 + $0x78] sm:$0xff]
        %v292 = vld [vmem:[%s236 + $0x80] sm:$0xff]
        %v293 = vld [vmem:[%s236 + $0x88] sm:$0xff]
        %v294 = vld [vmem:[%s236 + $0x90] sm:$0xff]
        %v295 = vld [vmem:[%s236 + $0x98] sm:$0xff]
        %v296 = vld [vmem:[%s236 + $0xa0] sm:$0xff]
        %v297 = vld [vmem:[%s236 + $0xa8] sm:$0xff]
        %v298 = vld [vmem:[%s236 + $0xb0] sm:$0xff]
        %v299 = vld [vmem:[%s236 + $0xb8] sm:$0xff]
        %v300 = vld [vmem:[%s236 + $0xc0] sm:$0xff]
        %v301 = vld [vmem:[%s236 + $0xc8] sm:$0xff]
        %v302 = vld [vmem:[%s236 + $0xd0] sm:$0xff]
        %v303 = vld [vmem:[%s236 + $0xd8] sm:$0xff]
        %v304 = vld [vmem:[%s236 + $0xe0] sm:$0xff]
        %v305 = vld [vmem:[%s236 + $0xe8] sm:$0xff]
        %v306 = vld [vmem:[%s236 + $0xf0] sm:$0xff]
        %v307 = vld [vmem:[%s236 + $0xf8] sm:$0xff]
        %v308 = vand.u32 2147483647, %v276
        %v309 = vand.u32 2147483647, %v277
        %v310 = vand.u32 2147483647, %v278
        %v311 = vand.u32 2147483647, %v279
        %v312 = vand.u32 2147483647, %v280
        %v313 = vand.u32 2147483647, %v281
        %v314 = vand.u32 2147483647, %v282
        %v315 = vand.u32 2147483647, %v283
        %v316 = vand.u32 2147483647, %v284
        %v317 = vand.u32 2147483647, %v285
        %v318 = vand.u32 2147483647, %v286
        %v319 = vand.u32 2147483647, %v287
        %v320 = vand.u32 2147483647, %v288
        %v321 = vand.u32 2147483647, %v289
        %v322 = vand.u32 2147483647, %v290
        %v323 = vand.u32 2147483647, %v291
        %v324 = vand.u32 2147483647, %v292
        %v325 = vand.u32 2147483647, %v293
        %v326 = vand.u32 2147483647, %v294
        %v327 = vand.u32 2147483647, %v295
        %v328 = vand.u32 2147483647, %v296
        %v329 = vand.u32 2147483647, %v297
        %v330 = vand.u32 2147483647, %v298
        %v331 = vand.u32 2147483647, %v299
        %v332 = vand.u32 2147483647, %v300
        %v333 = vand.u32 2147483647, %v301
        %v334 = vand.u32 2147483647, %v302
        %v335 = vand.u32 2147483647, %v303
        %v336 = vand.u32 2147483647, %v304
        %v337 = vand.u32 2147483647, %v305
        %v338 = vand.u32 2147483647, %v306
        %v339 = vand.u32 2147483647, %v307
        %340 = vst [vmem:[%s269] sm:$0xff] %v308
        %341 = vst [vmem:[%s269 + $0x8] sm:$0xff] %v309
        %342 = vst [vmem:[%s269 + $0x10] sm:$0xff] %v310
        %343 = vst [vmem:[%s269 + $0x18] sm:$0xff] %v311
        %344 = vst [vmem:[%s269 + $0x20] sm:$0xff] %v312
        %345 = vst [vmem:[%s269 + $0x28] sm:$0xff] %v313
        %346 = vst [vmem:[%s269 + $0x30] sm:$0xff] %v314
        %347 = vst [vmem:[%s269 + $0x38] sm:$0xff] %v315
        %348 = vst [vmem:[%s269 + $0x40] sm:$0xff] %v316
        %349 = vst [vmem:[%s269 + $0x48] sm:$0xff] %v317
        %350 = vst [vmem:[%s269 + $0x50] sm:$0xff] %v318
        %351 = vst [vmem:[%s269 + $0x58] sm:$0xff] %v319
        %352 = vst [vmem:[%s269 + $0x60] sm:$0xff] %v320
        %353 = vst [vmem:[%s269 + $0x68] sm:$0xff] %v321
        %354 = vst [vmem:[%s269 + $0x70] sm:$0xff] %v322
        %355 = vst [vmem:[%s269 + $0x78] sm:$0xff] %v323
        %356 = vst [vmem:[%s269 + $0x80] sm:$0xff] %v324
        %357 = vst [vmem:[%s269 + $0x88] sm:$0xff] %v325
        %358 = vst [vmem:[%s269 + $0x90] sm:$0xff] %v326
        %359 = vst [vmem:[%s269 + $0x98] sm:$0xff] %v327
        %360 = vst [vmem:[%s269 + $0xa0] sm:$0xff] %v328
        %361 = vst [vmem:[%s269 + $0xa8] sm:$0xff] %v329
        %362 = vst [vmem:[%s269 + $0xb0] sm:$0xff] %v330
        %363 = vst [vmem:[%s269 + $0xb8] sm:$0xff] %v331
        %364 = vst [vmem:[%s269 + $0xc0] sm:$0xff] %v332
        %365 = vst [vmem:[%s269 + $0xc8] sm:$0xff] %v333
        %366 = vst [vmem:[%s269 + $0xd0] sm:$0xff] %v334
        %367 = vst [vmem:[%s269 + $0xd8] sm:$0xff] %v335
        %368 = vst [vmem:[%s269 + $0xe0] sm:$0xff] %v336
        %369 = vst [vmem:[%s269 + $0xe8] sm:$0xff] %v337
        %370 = vst [vmem:[%s269 + $0xf0] sm:$0xff] %v338
        %371 = vst [vmem:[%s269 + $0xf8] sm:$0xff] %v339
        %p372 = scmp.eq.s32.totalorder %s31, 0
        // Predicated region
        $region41: #{tpu_custom_call.1} parent=31 // pred_check
          %p373 = pneg %p372
        $region42: #{tpu_custom_call.1} parent=31 // pred_check_branch
          %375 = sbr.rel (%p373) target = $region44
        $region43: #{tpu_custom_call.1} parent=31 // pred_region
          %v376 = vld [vmem:[%s2] sm:$0x3]
          %v378 = vlaneseq
          %v379 = vshrl.u32 %v378, 7
          %v380 = vsub.s32 0, %v379
          %v381 = vrot.slane %v376, %v380
          %v382 = vlaneseq
          %v383 = vshrl.u32 %v382, 7
          %v384 = vsub.s32 1, %v383
          %v385 = vrot.slane %v376, %v384
          %388 = vst [vmem:[%s262] sm:$0xff] %v381
          %389 = vst [vmem:[%s262 + $0x8] sm:$0xff] %v385
          %390 = vst [vmem:[%s262 + $0x10] sm:$0xff] %v381
          %391 = vst [vmem:[%s262 + $0x18] sm:$0xff] %v385
          %392 = vst [vmem:[%s262 + $0x20] sm:$0xff] %v381
          %393 = vst [vmem:[%s262 + $0x28] sm:$0xff] %v385
          %394 = vst [vmem:[%s262 + $0x30] sm:$0xff] %v381
          %395 = vst [vmem:[%s262 + $0x38] sm:$0xff] %v385
          %396 = vst [vmem:[%s262 + $0x40] sm:$0xff] %v381
          %397 = vst [vmem:[%s262 + $0x48] sm:$0xff] %v385
          %398 = vst [vmem:[%s262 + $0x50] sm:$0xff] %v381
          %399 = vst [vmem:[%s262 + $0x58] sm:$0xff] %v385
          %400 = vst [vmem:[%s262 + $0x60] sm:$0xff] %v381
          %401 = vst [vmem:[%s262 + $0x68] sm:$0xff] %v385
          %402 = vst [vmem:[%s262 + $0x70] sm:$0xff] %v381
          %403 = vst [vmem:[%s262 + $0x78] sm:$0xff] %v385
          %404 = vst [vmem:[%s262 + $0x80] sm:$0xff] %v381
          %405 = vst [vmem:[%s262 + $0x88] sm:$0xff] %v385
          %406 = vst [vmem:[%s262 + $0x90] sm:$0xff] %v381
          %407 = vst [vmem:[%s262 + $0x98] sm:$0xff] %v385
          %408 = vst [vmem:[%s262 + $0xa0] sm:$0xff] %v381
          %409 = vst [vmem:[%s262 + $0xa8] sm:$0xff] %v385
          %410 = vst [vmem:[%s262 + $0xb0] sm:$0xff] %v381
          %411 = vst [vmem:[%s262 + $0xb8] sm:$0xff] %v385
          %412 = vst [vmem:[%s262 + $0xc0] sm:$0xff] %v381
          %413 = vst [vmem:[%s262 + $0xc8] sm:$0xff] %v385
          %414 = vst [vmem:[%s262 + $0xd0] sm:$0xff] %v381
          %415 = vst [vmem:[%s262 + $0xd8] sm:$0xff] %v385
          %416 = vst [vmem:[%s262 + $0xe0] sm:$0xff] %v381
          %417 = vst [vmem:[%s262 + $0xe8] sm:$0xff] %v385
          %418 = vst [vmem:[%s262 + $0xf0] sm:$0xff] %v381
          %419 = vst [vmem:[%s262 + $0xf8] sm:$0xff] %v385
        $region44: #{tpu_custom_call.1} parent=31 // pred_fallthru
          _
        %v420 = vld [vmem:[%s262] sm:$0xff]
        %v421 = vld [vmem:[%s262 + $0x8] sm:$0xff]
        %v422 = vld [vmem:[%s262 + $0x10] sm:$0xff]
        %v423 = vld [vmem:[%s262 + $0x18] sm:$0xff]
        %v424 = vld [vmem:[%s262 + $0x20] sm:$0xff]
        %v425 = vld [vmem:[%s262 + $0x28] sm:$0xff]
        %v426 = vld [vmem:[%s262 + $0x30] sm:$0xff]
        %v427 = vld [vmem:[%s262 + $0x38] sm:$0xff]
        %v428 = vld [vmem:[%s262 + $0x40] sm:$0xff]
        %v429 = vld [vmem:[%s262 + $0x48] sm:$0xff]
        %v430 = vld [vmem:[%s262 + $0x50] sm:$0xff]
        %v431 = vld [vmem:[%s262 + $0x58] sm:$0xff]
        %v432 = vld [vmem:[%s262 + $0x60] sm:$0xff]
        %v433 = vld [vmem:[%s262 + $0x68] sm:$0xff]
        %v434 = vld [vmem:[%s262 + $0x70] sm:$0xff]
        %v435 = vld [vmem:[%s262 + $0x78] sm:$0xff]
        %v436 = vld [vmem:[%s262 + $0x80] sm:$0xff]
        %v437 = vld [vmem:[%s262 + $0x88] sm:$0xff]
        %v438 = vld [vmem:[%s262 + $0x90] sm:$0xff]
        %v439 = vld [vmem:[%s262 + $0x98] sm:$0xff]
        %v440 = vld [vmem:[%s262 + $0xa0] sm:$0xff]
        %v441 = vld [vmem:[%s262 + $0xa8] sm:$0xff]
        %v442 = vld [vmem:[%s262 + $0xb0] sm:$0xff]
        %v443 = vld [vmem:[%s262 + $0xb8] sm:$0xff]
        %v444 = vld [vmem:[%s262 + $0xc0] sm:$0xff]
        %v445 = vld [vmem:[%s262 + $0xc8] sm:$0xff]
        %v446 = vld [vmem:[%s262 + $0xd0] sm:$0xff]
        %v447 = vld [vmem:[%s262 + $0xd8] sm:$0xff]
        %v448 = vld [vmem:[%s262 + $0xe0] sm:$0xff]
        %v449 = vld [vmem:[%s262 + $0xe8] sm:$0xff]
        %v450 = vld [vmem:[%s262 + $0xf0] sm:$0xff]
        %v451 = vld [vmem:[%s262 + $0xf8] sm:$0xff]
        %v452 = vld [vmem:[#allocation5] sm:$0xff]
        %v453 = vld [vmem:[#allocation5 + $0x8] sm:$0xff]
        %v454 = vld [vmem:[#allocation5 + $0x10] sm:$0xff]
        %v455 = vld [vmem:[#allocation5 + $0x18] sm:$0xff]
        %v456 = vld [vmem:[#allocation5 + $0x20] sm:$0xff]
        %v457 = vld [vmem:[#allocation5 + $0x28] sm:$0xff]
        %v458 = vld [vmem:[#allocation5 + $0x30] sm:$0xff]
        %v459 = vld [vmem:[#allocation5 + $0x38] sm:$0xff]
        %v460 = vld [vmem:[#allocation5 + $0x40] sm:$0xff]
        %v461 = vld [vmem:[#allocation5 + $0x48] sm:$0xff]
        %v462 = vld [vmem:[#allocation5 + $0x50] sm:$0xff]
        %v463 = vld [vmem:[#allocation5 + $0x58] sm:$0xff]
        %v464 = vld [vmem:[#allocation5 + $0x60] sm:$0xff]
        %v465 = vld [vmem:[#allocation5 + $0x68] sm:$0xff]
        %v466 = vld [vmem:[#allocation5 + $0x70] sm:$0xff]
        %v467 = vld [vmem:[#allocation5 + $0x78] sm:$0xff]
        %v468 = vld [vmem:[#allocation5 + $0x80] sm:$0xff]
        %v469 = vld [vmem:[#allocation5 + $0x88] sm:$0xff]
        %v470 = vld [vmem:[#allocation5 + $0x90] sm:$0xff]
        %v471 = vld [vmem:[#allocation5 + $0x98] sm:$0xff]
        %v472 = vld [vmem:[#allocation5 + $0xa0] sm:$0xff]
        %v473 = vld [vmem:[#allocation5 + $0xa8] sm:$0xff]
        %v474 = vld [vmem:[#allocation5 + $0xb0] sm:$0xff]
        %v475 = vld [vmem:[#allocation5 + $0xb8] sm:$0xff]
        %v476 = vld [vmem:[#allocation5 + $0xc0] sm:$0xff]
        %v477 = vld [vmem:[#allocation5 + $0xc8] sm:$0xff]
        %v478 = vld [vmem:[#allocation5 + $0xd0] sm:$0xff]
        %v479 = vld [vmem:[#allocation5 + $0xd8] sm:$0xff]
        %v480 = vld [vmem:[#allocation5 + $0xe0] sm:$0xff]
        %v481 = vld [vmem:[#allocation5 + $0xe8] sm:$0xff]
        %v482 = vld [vmem:[#allocation5 + $0xf0] sm:$0xff]
        %v483 = vld [vmem:[#allocation5 + $0xf8] sm:$0xff]
        %v484 = vld [vmem:[#allocation5 + $0x100] sm:$0xff]
        %v485 = vld [vmem:[#allocation5 + $0x108] sm:$0xff]
        %v486 = vld [vmem:[#allocation5 + $0x110] sm:$0xff]
        %v487 = vld [vmem:[#allocation5 + $0x118] sm:$0xff]
        %v488 = vld [vmem:[#allocation5 + $0x120] sm:$0xff]
        %v489 = vld [vmem:[#allocation5 + $0x128] sm:$0xff]
        %v490 = vld [vmem:[#allocation5 + $0x130] sm:$0xff]
        %v491 = vld [vmem:[#allocation5 + $0x138] sm:$0xff]
        %v492 = vld [vmem:[#allocation5 + $0x140] sm:$0xff]
        %v493 = vld [vmem:[#allocation5 + $0x148] sm:$0xff]
        %v494 = vld [vmem:[#allocation5 + $0x150] sm:$0xff]
        %v495 = vld [vmem:[#allocation5 + $0x158] sm:$0xff]
        %v496 = vld [vmem:[#allocation5 + $0x160] sm:$0xff]
        %v497 = vld [vmem:[#allocation5 + $0x168] sm:$0xff]
        %v498 = vld [vmem:[#allocation5 + $0x170] sm:$0xff]
        %v499 = vld [vmem:[#allocation5 + $0x178] sm:$0xff]
        %v500 = vld [vmem:[#allocation5 + $0x180] sm:$0xff]
        %v501 = vld [vmem:[#allocation5 + $0x188] sm:$0xff]
        %v502 = vld [vmem:[#allocation5 + $0x190] sm:$0xff]
        %v503 = vld [vmem:[#allocation5 + $0x198] sm:$0xff]
        %v504 = vld [vmem:[#allocation5 + $0x1a0] sm:$0xff]
        %v505 = vld [vmem:[#allocation5 + $0x1a8] sm:$0xff]
        %v506 = vld [vmem:[#allocation5 + $0x1b0] sm:$0xff]
        %v507 = vld [vmem:[#allocation5 + $0x1b8] sm:$0xff]
        %v508 = vld [vmem:[#allocation5 + $0x1c0] sm:$0xff]
        %v509 = vld [vmem:[#allocation5 + $0x1c8] sm:$0xff]
        %v510 = vld [vmem:[#allocation5 + $0x1d0] sm:$0xff]
        %v511 = vld [vmem:[#allocation5 + $0x1d8] sm:$0xff]
        %v512 = vld [vmem:[#allocation5 + $0x1e0] sm:$0xff]
        %v513 = vld [vmem:[#allocation5 + $0x1e8] sm:$0xff]
        %v514 = vld [vmem:[#allocation5 + $0x1f0] sm:$0xff]
        %v515 = vld [vmem:[#allocation5 + $0x1f8] sm:$0xff]
        %516 = vmatprep.subr.mxu0 %v453
        %517 = vmatpush1.msra.mxu0 %v452
        %518 = vmatprep.subr.mxu0 %v455
        %519 = vmatpush1.msra.mxu0 %v454
        %520 = vmatprep.subr.mxu0 %v457
        %521 = vmatpush1.msra.mxu0 %v456
        %522 = vmatprep.subr.mxu0 %v459
        %523 = vmatpush1.msra.mxu0 %v458
        %524 = vmatprep.subr.mxu0 %v461
        %525 = vmatpush1.msra.mxu0 %v460
        %526 = vmatprep.subr.mxu0 %v463
        %527 = vmatpush1.msra.mxu0 %v462
        %528 = vmatprep.subr.mxu0 %v465
        %529 = vmatpush1.msra.mxu0 %v464
        %530 = vmatprep.subr.mxu0 %v467
        %531 = vmatpush1.msra.mxu0 %v466
        %532 = vmatprep.subr.mxu0 %v469
        %533 = vmatpush1.msra.mxu0 %v468
        %534 = vmatprep.subr.mxu0 %v471
        %535 = vmatpush1.msra.mxu0 %v470
        %536 = vmatprep.subr.mxu0 %v473
        %537 = vmatpush1.msra.mxu0 %v472
        %538 = vmatprep.subr.mxu0 %v475
        %539 = vmatpush1.msra.mxu0 %v474
        %540 = vmatprep.subr.mxu0 %v477
        %541 = vmatpush1.msra.mxu0 %v476
        %542 = vmatprep.subr.mxu0 %v479
        %543 = vmatpush1.msra.mxu0 %v478
        %544 = vmatprep.subr.mxu0 %v481
        %545 = vmatpush1.msra.mxu0 %v480
        %546 = vmatprep.subr.mxu0 %v483
        %547 = vmatpush1.msra.mxu0 %v482
        %548 = vmatprep.subr.mxu0 %v485
        %549 = vmatpush1.msra.mxu0 %v484
        %550 = vmatprep.subr.mxu0 %v487
        %551 = vmatpush1.msra.mxu0 %v486
        %552 = vmatprep.subr.mxu0 %v489
        %553 = vmatpush1.msra.mxu0 %v488
        %554 = vmatprep.subr.mxu0 %v491
        %555 = vmatpush1.msra.mxu0 %v490
        %556 = vmatprep.subr.mxu0 %v493
        %557 = vmatpush1.msra.mxu0 %v492
        %558 = vmatprep.subr.mxu0 %v495
        %559 = vmatpush1.msra.mxu0 %v494
        %560 = vmatprep.subr.mxu0 %v497
        %561 = vmatpush1.msra.mxu0 %v496
        %562 = vmatprep.subr.mxu0 %v499
        %563 = vmatpush1.msra.mxu0 %v498
        %564 = vmatprep.subr.mxu0 %v501
        %565 = vmatpush1.msra.mxu0 %v500
        %566 = vmatprep.subr.mxu0 %v503
        %567 = vmatpush1.msra.mxu0 %v502
        %568 = vmatprep.subr.mxu0 %v505
        %569 = vmatpush1.msra.mxu0 %v504
        %570 = vmatprep.subr.mxu0 %v507
        %571 = vmatpush1.msra.mxu0 %v506
        %572 = vmatprep.subr.mxu0 %v509
        %573 = vmatpush1.msra.mxu0 %v508
        %574 = vmatprep.subr.mxu0 %v511
        %575 = vmatpush1.msra.mxu0 %v510
        %576 = vmatprep.subr.mxu0 %v513
        %577 = vmatpush1.msra.mxu0 %v512
        %578 = vmatprep.subr.mxu0 %v515
        %579 = vmatpush1.msra.mxu0 %v514
        %580 = vmatprep.mubr.f32.mxu0 %v309
        %581 = vmatmul.mubr.f32.gmra.mrb[0].mxu0 %v308
        %v582 = vpop.f32.mrb[0].mxu0
        %v583 = vadd.f32 0.0, %v582
        %v584 = vpop.f32.mrb[0].mxu0
        %v585 = vadd.f32 0.0, %v584
        %586 = vmatprep.mubr.f32.mxu0 %v311
        %587 = vmatmul.mubr.f32.gmra.mrb[0].mxu0 %v310
        %v588 = vpop.f32.mrb[0].mxu0
        %v589 = vadd.f32 0.0, %v588
        %v590 = vpop.f32.mrb[0].mxu0
        %v591 = vadd.f32 0.0, %v590
        %592 = vmatprep.mubr.f32.mxu0 %v313
        %593 = vmatmul.mubr.f32.gmra.mrb[0].mxu0 %v312
        %v594 = vpop.f32.mrb[0].mxu0
        %v595 = vadd.f32 0.0, %v594
        %v596 = vpop.f32.mrb[0].mxu0
        %v597 = vadd.f32 0.0, %v596
        %598 = vmatprep.mubr.f32.mxu0 %v315
        %599 = vmatmul.mubr.f32.gmra.mrb[0].mxu0 %v314
        %v600 = vpop.f32.mrb[0].mxu0
        %v601 = vadd.f32 0.0, %v600
        %v602 = vpop.f32.mrb[0].mxu0
        %v603 = vadd.f32 0.0, %v602
        %604 = vmatprep.mubr.f32.mxu0 %v317
        %605 = vmatmul.mubr.f32.gmra.mrb[0].mxu0 %v316
        %v606 = vpop.f32.mrb[0].mxu0
        %v607 = vadd.f32 0.0, %v606
        %v608 = vpop.f32.mrb[0].mxu0
        %v609 = vadd.f32 0.0, %v608
        %610 = vmatprep.mubr.f32.mxu0 %v319
        %611 = vmatmul.mubr.f32.gmra.mrb[0].mxu0 %v318
        %v612 = vpop.f32.mrb[0].mxu0
        %v613 = vadd.f32 0.0, %v612
        %v614 = vpop.f32.mrb[0].mxu0
        %v615 = vadd.f32 0.0, %v614
        %616 = vmatprep.mubr.f32.mxu0 %v321
        %617 = vmatmul.mubr.f32.gmra.mrb[0].mxu0 %v320
        %v618 = vpop.f32.mrb[0].mxu0
        %v619 = vadd.f32 0.0, %v618
        %v620 = vpop.f32.mrb[0].mxu0
        %v621 = vadd.f32 0.0, %v620
        %622 = vmatprep.mubr.f32.mxu0 %v323
        %623 = vmatmul.mubr.f32.gmra.mrb[0].mxu0 %v322
        %v624 = vpop.f32.mrb[0].mxu0
        %v625 = vadd.f32 0.0, %v624
        %v626 = vpop.f32.mrb[0].mxu0
        %v627 = vadd.f32 0.0, %v626
        %628 = vmatprep.mubr.f32.mxu0 %v325
        %629 = vmatmul.mubr.f32.gmra.mrb[0].mxu0 %v324
        %v630 = vpop.f32.mrb[0].mxu0
        %v631 = vadd.f32 0.0, %v630
        %v632 = vpop.f32.mrb[0].mxu0
        %v633 = vadd.f32 0.0, %v632
        %634 = vmatprep.mubr.f32.mxu0 %v327
        %635 = vmatmul.mubr.f32.gmra.mrb[0].mxu0 %v326
        %v636 = vpop.f32.mrb[0].mxu0
        %v637 = vadd.f32 0.0, %v636
        %v638 = vpop.f32.mrb[0].mxu0
        %v639 = vadd.f32 0.0, %v638
        %640 = vmatprep.mubr.f32.mxu0 %v329
        %641 = vmatmul.mubr.f32.gmra.mrb[0].mxu0 %v328
        %v642 = vpop.f32.mrb[0].mxu0
        %v643 = vadd.f32 0.0, %v642
        %v644 = vpop.f32.mrb[0].mxu0
        %v645 = vadd.f32 0.0, %v644
        %646 = vmatprep.mubr.f32.mxu0 %v331
        %647 = vmatmul.mubr.f32.gmra.mrb[0].mxu0 %v330
        %v648 = vpop.f32.mrb[0].mxu0
        %v649 = vadd.f32 0.0, %v648
        %v650 = vpop.f32.mrb[0].mxu0
        %v651 = vadd.f32 0.0, %v650
        %652 = vmatprep.mubr.f32.mxu0 %v333
        %653 = vmatmul.mubr.f32.gmra.mrb[0].mxu0 %v332
        %v654 = vpop.f32.mrb[0].mxu0
        %v655 = vadd.f32 0.0, %v654
        %v656 = vpop.f32.mrb[0].mxu0
        %v657 = vadd.f32 0.0, %v656
        %658 = vmatprep.mubr.f32.mxu0 %v335
        %659 = vmatmul.mubr.f32.gmra.mrb[0].mxu0 %v334
        %v660 = vpop.f32.mrb[0].mxu0
        %v661 = vadd.f32 0.0, %v660
        %v662 = vpop.f32.mrb[0].mxu0
        %v663 = vadd.f32 0.0, %v662
        %664 = vmatprep.mubr.f32.mxu0 %v337
        %665 = vmatmul.mubr.f32.gmra.mrb[0].mxu0 %v336
        %v666 = vpop.f32.mrb[0].mxu0
        %v667 = vadd.f32 0.0, %v666
        %v668 = vpop.f32.mrb[0].mxu0
        %v669 = vadd.f32 0.0, %v668
        %670 = vmatprep.mubr.f32.mxu0 %v339
        %671 = vmatmul.mubr.f32.gmra.mrb[0].mxu0 %v338
        %v672 = vpop.f32.mrb[0].mxu0
        %v673 = vadd.f32 0.0, %v672
        %v674 = vpop.f32.mrb[0].mxu0
        %v675 = vadd.f32 0.0, %v674
        %676 = vdwg.mxu0
        %v677 = vadd.f32 %v420, %v583
        %v678 = vadd.f32 %v421, %v585
        %v679 = vadd.f32 %v422, %v589
        %v680 = vadd.f32 %v423, %v591
        %v681 = vadd.f32 %v424, %v595
        %v682 = vadd.f32 %v425, %v597
        %v683 = vadd.f32 %v426, %v601
        %v684 = vadd.f32 %v427, %v603
        %v685 = vadd.f32 %v428, %v607
        %v686 = vadd.f32 %v429, %v609
        %v687 = vadd.f32 %v430, %v613
        %v688 = vadd.f32 %v431, %v615
        %v689 = vadd.f32 %v432, %v619
        %v690 = vadd.f32 %v433, %v621
        %v691 = vadd.f32 %v434, %v625
        %v692 = vadd.f32 %v435, %v627
        %v693 = vadd.f32 %v436, %v631
        %v694 = vadd.f32 %v437, %v633
        %v695 = vadd.f32 %v438, %v637
        %v696 = vadd.f32 %v439, %v639
        %v697 = vadd.f32 %v440, %v643
        %v698 = vadd.f32 %v441, %v645
        %v699 = vadd.f32 %v442, %v649
        %v700 = vadd.f32 %v443, %v651
        %v701 = vadd.f32 %v444, %v655
        %v702 = vadd.f32 %v445, %v657
        %v703 = vadd.f32 %v446, %v661
        %v704 = vadd.f32 %v447, %v663
        %v705 = vadd.f32 %v448, %v667
        %v706 = vadd.f32 %v449, %v669
        %v707 = vadd.f32 %v450, %v673
        %v708 = vadd.f32 %v451, %v675
        %709 = vst [vmem:[%s262] sm:$0xff] %v677
        %710 = vst [vmem:[%s262 + $0x8] sm:$0xff] %v678
        %711 = vst [vmem:[%s262 + $0x10] sm:$0xff] %v679
        %712 = vst [vmem:[%s262 + $0x18] sm:$0xff] %v680
        %713 = vst [vmem:[%s262 + $0x20] sm:$0xff] %v681
        %714 = vst [vmem:[%s262 + $0x28] sm:$0xff] %v682
        %715 = vst [vmem:[%s262 + $0x30] sm:$0xff] %v683
        %716 = vst [vmem:[%s262 + $0x38] sm:$0xff] %v684
        %717 = vst [vmem:[%s262 + $0x40] sm:$0xff] %v685
        %718 = vst [vmem:[%s262 + $0x48] sm:$0xff] %v686
        %719 = vst [vmem:[%s262 + $0x50] sm:$0xff] %v687
        %720 = vst [vmem:[%s262 + $0x58] sm:$0xff] %v688
        %721 = vst [vmem:[%s262 + $0x60] sm:$0xff] %v689
        %722 = vst [vmem:[%s262 + $0x68] sm:$0xff] %v690
        %723 = vst [vmem:[%s262 + $0x70] sm:$0xff] %v691
        %724 = vst [vmem:[%s262 + $0x78] sm:$0xff] %v692
        %725 = vst [vmem:[%s262 + $0x80] sm:$0xff] %v693
        %726 = vst [vmem:[%s262 + $0x88] sm:$0xff] %v694
        %727 = vst [vmem:[%s262 + $0x90] sm:$0xff] %v695
        %728 = vst [vmem:[%s262 + $0x98] sm:$0xff] %v696
        %729 = vst [vmem:[%s262 + $0xa0] sm:$0xff] %v697
        %730 = vst [vmem:[%s262 + $0xa8] sm:$0xff] %v698
        %731 = vst [vmem:[%s262 + $0xb0] sm:$0xff] %v699
        %732 = vst [vmem:[%s262 + $0xb8] sm:$0xff] %v700
        %733 = vst [vmem:[%s262 + $0xc0] sm:$0xff] %v701
        %734 = vst [vmem:[%s262 + $0xc8] sm:$0xff] %v702
        %735 = vst [vmem:[%s262 + $0xd0] sm:$0xff] %v703
        %736 = vst [vmem:[%s262 + $0xd8] sm:$0xff] %v704
        %737 = vst [vmem:[%s262 + $0xe0] sm:$0xff] %v705
        %738 = vst [vmem:[%s262 + $0xe8] sm:$0xff] %v706
        %739 = vst [vmem:[%s262 + $0xf0] sm:$0xff] %v707
        %740 = vst [vmem:[%s262 + $0xf8] sm:$0xff] %v708
        %s741 = sand.u32 %s121, 1
        %s742 = scalar_lea.sflag [#allocation4], %s741
        %s743 = sand.u32 %s121, 1
        %s744 = smul.addr %s743, 256
        %s745 = scalar_lea.vmem [#allocation7], %s744
        %s746 = sand.u32 %s149, 1
        %s747 = scalar_lea.sflag [#allocation9], %s746
        %s748 = sand.u32 %s149, 1
        %s749 = smul.addr %s748, 256
        %s750 = scalar_lea.vmem [#allocation8], %s749
        // Predicated region
        $region45: #{tpu_custom_call.1} parent=31 // pred_check
          %p751 = pneg %p131
        $region46: #{tpu_custom_call.1} parent=31 // pred_check_branch
          %753 = sbr.rel (%p751) target = $region48
        $region47: #{tpu_custom_call.1} parent=31 // pred_region
          %s754 = smul.u32 16, %s30
          %s756 = ssub.s32 4096, 4096
          %757 = vsyncadd %s742, %s756
          %s758 = smul.addr %s754, 2
          %s759 = smul.addr %s758, 128
          %s760 = scalar_lea.hbm %s3, %s759
          %s761 = sshll.u32 %s745, 4
          %s762 = int_to_ptr.vmem [resolvable:$true] %s761
          %767 = dma.vmem_to_hbm [thread:$0]  %s762, 4096, %s760, %s742, 256, 256, 16
        $region48: #{tpu_custom_call.1} parent=31 // pred_fallthru
          _
        // Predicated region
        $region49: #{tpu_custom_call.1} parent=31 // pred_check
          %p768 = pneg %p159
        $region50: #{tpu_custom_call.1} parent=31 // pred_check_branch
          %770 = sbr.rel (%p768) target = $region52
        $region51: #{tpu_custom_call.1} parent=31 // pred_region
          %s771 = smul.u32 16, %s30
          %s772 = smul.u32 2, %s31
          %s774 = ssub.s32 4096, 4096
          %775 = vsyncadd %s747, %s774
          %s776 = smul.addr %s771, 2
          %s777 = sadd.s32 %s772, %s776
          %s778 = smul.addr %s777, 128
          %s779 = scalar_lea.hbm %s4, %s778
          %s780 = sshll.u32 %s750, 4
          %s781 = int_to_ptr.vmem [resolvable:$true] %s780
          %786 = dma.vmem_to_hbm [thread:$0]  %s781, 4096, %s779, %s747, 256, 256, 16
        $region52: #{tpu_custom_call.1} parent=31 // pred_fallthru
          _
      $region32: #{tpu_custom_call.1} parent=5 // pred_fallthru
        _
      %p787 = scmp.le.s32.totalorder 2, %s21
      // Predicated region
      $region53: #{tpu_custom_call.1} parent=5 // pred_check
        %p788 = pneg %p787
      $region54: #{tpu_custom_call.1} parent=5 // pred_check_branch
        %790 = sbr.rel (%p788) target = $region56
      $region55: #{tpu_custom_call.1} parent=5 // pred_region
        %s791 = ssub.s32 %s21, 2
        // Predicated region
        $region57: #{tpu_custom_call.1} parent=55 // pred_check
          %p792 = pneg %p137
        $region58: #{tpu_custom_call.1} parent=55 // pred_check_branch
          %794 = sbr.rel (%p792) target = $region60
        $region59: #{tpu_custom_call.1} parent=55 // pred_region
          %s795 = sand.u32 %s122, 1
          %s796 = scalar_lea.sflag [#allocation4], %s795
          %s797 = sand.u32 %s122, 1
          %s798 = smul.addr %s797, 256
          %s799 = scalar_lea.vmem [#allocation7], %s798
          %800 = dma.done %s796, 4096
        $region60: #{tpu_custom_call.1} parent=55 // pred_fallthru
          _
        // Predicated region
        $region61: #{tpu_custom_call.1} parent=55 // pred_check
          %p801 = pneg %p165
        $region62: #{tpu_custom_call.1} parent=55 // pred_check_branch
          %803 = sbr.rel (%p801) target = $region64
        $region63: #{tpu_custom_call.1} parent=55 // pred_region
          %s804 = sand.u32 %s150, 1
          %s805 = scalar_lea.sflag [#allocation9], %s804
          %s806 = sand.u32 %s150, 1
          %s807 = smul.addr %s806, 256
          %s808 = scalar_lea.vmem [#allocation8], %s807
          %809 = dma.done %s805, 4096
        $region64: #{tpu_custom_call.1} parent=55 // pred_fallthru
          _
      $region56: #{tpu_custom_call.1} parent=5 // pred_fallthru
        _
    $region6: #{tpu_custom_call.1} parent=1 // loop_footer
      %s25 = sadd.s32 1, %s21
    $region7: #{tpu_custom_call.1} parent=1 // loop_footer_branch
      %20 = sbr.rel target = $region3
    $region8: #{tpu_custom_call.1} parent=1 // loop_exit
      _
    %810 = vsyncpa [#allocation3], 1
    %s811 = scalar_lea.sflag [#allocation3], 1
    %812 = vsyncpa %s811, 1
    %813 = vsyncpa [#allocation6], 1
    %814 = vsyncpa [#allocation4], 1
    %s815 = scalar_lea.sflag [#allocation4], 1
    %816 = vsyncpa %s815, 1
    %817 = vsyncpa [#allocation9], 1
    %s818 = scalar_lea.sflag [#allocation9], 1
    %819 = vsyncpa %s818, 1

</llo_original>
